<compile_context>
chip_gen: v7x
topology: tpu7x:2x2x1
jax: 0.10.0
libtpu: 0.0.40
codegen_flags: <defaults>
</compile_context>

<pallas_src>
import jax
import jax.numpy as jnp
from jax.experimental import pallas as pl
from jax.experimental.pallas import tpu as pltpu


def _layer_scale_kernel(x_ref, g_ref, o_ref):
    # x_ref: (TILE_R, D_eff) tile in VMEM; g_ref: (1, D_eff) resident gamma.
    # Broadcast multiply on the VPU; gamma kept f32, product cast to output dtype.
    o_ref[...] = (x_ref[...] * g_ref[...]).astype(o_ref.dtype)


def _choose_lane_fold(rows, d):
    """Pick k so the packed last dim k*d is a lane-dense multiple of 128 (or k=1)."""
    if d % 128 == 0:
        return 1
    if 128 % d != 0:
        return 1
    k0 = 128 // d
    for mult in (4, 2, 1):  # prefer wider lane slabs: 512 / 256 / 128 lanes
        k = k0 * mult
        if rows % k == 0:
            return k
    return 1


def _choose_tile_rows(rows_eff, d_eff, itemsize):
    """Largest row tile whose double-buffered in+out fits a conservative VMEM budget."""
    vmem_budget = 8 * 1024 * 1024  # ~2x(in)+2x(out) per step; safe on v5e/v6e/v7x defaults
    max_rows = max(8, vmem_budget // (4 * d_eff * itemsize))
    tile = min(1024, max_rows)
    tile = (tile // 8) * 8  # multiple of 8 sublanes (f32); also valid for bf16
    if tile >= rows_eff:
        return rows_eff  # full-extent block: no divisibility requirement
    return max(8, tile)


def layer_scale(x, gamma):
    """x: (..., D) array, gamma: (D,) array -> same shape as x, dtype of x."""
    orig_shape = x.shape
    d = orig_shape[-1]
    rows = 1
    for s in orig_shape[:-1]:
        rows *= s

    k = _choose_lane_fold(rows, d)
    rows_eff = rows // k
    d_eff = d * k

    x2d = x.reshape(rows_eff, d_eff)
    gamma_f32 = gamma.astype(jnp.float32)
    if k > 1:
        gamma2d = jnp.tile(gamma_f32, (k,)).reshape(1, d_eff)
    else:
        gamma2d = gamma_f32.reshape(1, d_eff)

    tile_r = _choose_tile_rows(rows_eff, d_eff, x.dtype.itemsize)
    grid = (pl.cdiv(rows_eff, tile_r),)

    out2d = pl.pallas_call(
        _layer_scale_kernel,
        out_shape=jax.ShapeDtypeStruct((rows_eff, d_eff), x.dtype),
        grid_spec=pltpu.PrefetchScalarGridSpec(
            num_scalar_prefetch=0,
            grid=grid,
            in_specs=[
                pl.BlockSpec((tile_r, d_eff), lambda i: (i, 0)),  # streamed x tiles
                pl.BlockSpec((1, d_eff), lambda i: (0, 0)),       # gamma, resident
            ],
            out_specs=pl.BlockSpec((tile_r, d_eff), lambda i: (i, 0)),
        ),
        compiler_params=pltpu.CompilerParams(
            dimension_semantics=("parallel",),  # no reduction; lets v7x shard over 2 TCs
        ),
    )(x2d, gamma2d)

    return out2d.reshape(orig_shape)


class LayerScaleJax:
    """Mirror of the PyTorch LayerScale module (forward only)."""

    def __init__(self, dim, init_values=1e-05, inplace=False):
        # `inplace` is a no-op in JAX (immutable arrays); result is identical.
        self.inplace = inplace
        self.gamma = init_values * jnp.ones((dim,), dtype=jnp.float32)

    def __call__(self, x):
        return layer_scale(x, self.gamma)


if __name__ == "__main__":
    key = jax.random.PRNGKey(0)
    B, N, D = 2, 8, 32
    x = jax.random.normal(key, (B, N, D), dtype=jnp.float32)

    module = LayerScaleJax(dim=D, init_values=1e-05)
    out = module(x)
    out = jax.block_until_ready(out)

    # Reference check in plain JAX
    ref = x * module.gamma
    assert out.shape == x.shape and out.dtype == x.dtype
    assert jnp.allclose(out, ref, atol=1e-6, rtol=1e-6)

    print("KERNEL_OK")
</pallas_src>

<mosaic_0001>
module attributes {stable_mosaic.version = 11 : i64} {
  func.func @_layer_scale_kernel(%arg0: i32, %arg1: memref<1x512xf32, #tpu.memory_space<vmem>>, %arg2: memref<1x512xf32, #tpu.memory_space<vmem>>, %arg3: memref<1x512xf32, #tpu.memory_space<vmem>>) attributes {dimension_semantics = [#tpu.dimension_semantics<parallel>], iteration_bounds = array<i64: 1>, scalar_prefetch = 0 : i64, scratch_operands = 0 : i64, tpu.core_type = #tpu.core_type<tc>, window_params = [{transform_indices = @transform_0, window_bounds = array<i64: 1, 512>}, {pipeline_mode = #tpu.pipeline_mode<synchronous>, transform_indices = @transform_1, window_bounds = array<i64: 1, 512>}, {transform_indices = @transform_2, window_bounds = array<i64: 1, 512>}]} {
    %c0 = arith.constant 0 : index
    %c0_0 = arith.constant 0 : index
    %0 = vector.load %arg1[%c0, %c0_0] : memref<1x512xf32, #tpu.memory_space<vmem>>, vector<1x512xf32>
    %c0_1 = arith.constant 0 : index
    %c0_2 = arith.constant 0 : index
    %1 = vector.load %arg2[%c0_1, %c0_2] : memref<1x512xf32, #tpu.memory_space<vmem>>, vector<1x512xf32>
    %2 = arith.mulf %0, %1 : vector<1x512xf32>
    %c0_3 = arith.constant 0 : index
    %c0_4 = arith.constant 0 : index
    %3 = vector.load %arg3[%c0_3, %c0_4] : memref<1x512xf32, #tpu.memory_space<vmem>>, vector<1x512xf32>
    tpu.vector_store %arg3[%c0_3, %c0_4], %2 {strides = array<i32>} : memref<1x512xf32, #tpu.memory_space<vmem>>, vector<1x512xf32>,
    return
  }
  func.func @transform_0(%arg0: i32) -> (i32, i32) {
    %c0_i32 = arith.constant 0 : i32
    %c0_i32_0 = arith.constant 0 : i32
    return %arg0, %c0_i32 : i32, i32
  }
  func.func @transform_1(%arg0: i32) -> (i32, i32) {
    %c0_i32 = arith.constant 0 : i32
    %c0_i32_0 = arith.constant 0 : i32
    %c0_i32_1 = arith.constant 0 : i32
    return %c0_i32, %c0_i32_0 : i32, i32
  }
  func.func @transform_2(%arg0: i32) -> (i32, i32) {
    %c0_i32 = arith.constant 0 : i32
    %c0_i32_0 = arith.constant 0 : i32
    return %arg0, %c0_i32 : i32, i32
  }
}

</mosaic_0001>

<llo_original>
// kernel: tpu_custom_call.1
$region0: #{tpu_custom_call.1}
  #allocation0 [shape = 'u32[]', space=smem, size = 0x4, offset = 0x4, fixed_abs, tag = 'smem constant byte address 0x4 - core index']
  #allocation1 [shape = 'u32[144,128]{1,0:T(1,128)}', space=vmem, size = 0x12000, scoped, tag = 'internal scratch']
  %s0 = inlined_call_operand.hbm [shape: f32[1,512], index: 0, kind: input, shape index: {}]
  %s1 = inlined_call_operand.hbm [shape: f32[1,512], index: 1, kind: input, shape index: {}]
  %s2 = inlined_call_operand.hbm [shape: f32[1,512], index: 2, kind: output, shape index: {}]
  %s3 = sld [smem:[#allocation0]]
  $region26: #{tpu_custom_call.1} parent=0
    _
  %s5 = ssub.s32 1, %s3
  %s6 = scalar_select 0, %s5, %s3
  $region1: #{tpu_custom_call.1} parent=0
    #allocation2 [shape = 'u8[2048]{0}', space=vmem, size = 0x800, scoped, tag = 'input window, operand 0, single buffered']
    #allocation3 [shape = 's32[1]{0}', space=sflag, size = 0x4, scoped, tag = 'scoped memory for tpu_custom_call.1']
    #allocation4 [shape = 's32[1]{0}', space=sflag, size = 0x4, scoped, tag = 'scoped memory for tpu_custom_call.1']
    #allocation5 [shape = 'u8[2048]{0}', space=vmem, size = 0x800, scoped, tag = 'input window, operand 1, single buffered']
    #allocation6 [shape = 's32[1]{0}', space=sflag, size = 0x4, scoped, tag = 'scoped memory for tpu_custom_call.1']
    #allocation7 [shape = 'u8[2048]{0}', space=vmem, size = 0x800, scoped, tag = 'output window, operand 0, single buffered']
    %7 = vsyncpa [#allocation3], 0
    %8 = vsyncpa [#allocation6], 0
    %9 = vsyncpa [#allocation4], 0
    // Predicated region
    $region2: #{tpu_custom_call.1} parent=1 // pred_check
      _
    $region3: #{tpu_custom_call.1} parent=1 // pred_check_branch
      %11 = sbr.rel (0) target = $region5
    $region4: #{tpu_custom_call.1} parent=1 // pred_region
      %s13 = ssub.s32 64, 64
      %14 = vsyncadd [#allocation3], %s13
      %s16 = sshll.u32 [#allocation2], 4
      %s17 = int_to_ptr.vmem [resolvable:$true] %s16
      %19 = dma.hbm_to_vmem [thread:$0]  %s0, 64, %s17, [#allocation3]
    $region5: #{tpu_custom_call.1} parent=1 // pred_fallthru
      _
    // Predicated region
    $region6: #{tpu_custom_call.1} parent=1 // pred_check
      _
    $region7: #{tpu_custom_call.1} parent=1 // pred_check_branch
      %21 = sbr.rel (0) target = $region9
    $region8: #{tpu_custom_call.1} parent=1 // pred_region
      %s23 = ssub.s32 64, 64
      %24 = vsyncadd [#allocation6], %s23
      %s26 = sshll.u32 [#allocation5], 4
      %s27 = int_to_ptr.vmem [resolvable:$true] %s26
      %29 = dma.hbm_to_vmem [thread:$0]  %s1, 64, %s27, [#allocation6]
    $region9: #{tpu_custom_call.1} parent=1 // pred_fallthru
      _
    // Predicated region
    $region10: #{tpu_custom_call.1} parent=1 // pred_check
      _
    $region11: #{tpu_custom_call.1} parent=1 // pred_check_branch
      %31 = sbr.rel (0) target = $region13
    $region12: #{tpu_custom_call.1} parent=1 // pred_region
      %32 = dma.done [#allocation3], 64
    $region13: #{tpu_custom_call.1} parent=1 // pred_fallthru
      _
    // Predicated region
    $region14: #{tpu_custom_call.1} parent=1 // pred_check
      _
    $region15: #{tpu_custom_call.1} parent=1 // pred_check_branch
      %34 = sbr.rel (0) target = $region17
    $region16: #{tpu_custom_call.1} parent=1 // pred_region
      %35 = dma.done [#allocation6], 64
    $region17: #{tpu_custom_call.1} parent=1 // pred_fallthru
      _
    %v36 = vld [vmem:[#allocation2] sm:$0xf]
    %v37 = vld [vmem:[#allocation5] sm:$0xf]
    %v38 = vmul.f32 %v36, %v37
    %v39 = vlaneseq
    %vm40 = vcmp.ge.s32.totalorder %v39, 0
    %vm41 = vcmp.lt.s32.totalorder %v39, 512
    %vm42 = vmand %vm40, %vm41
    %43 = vst.msk [vmem:[#allocation7] sm:$0xf] %vm42, %v38
    // Predicated region
    $region18: #{tpu_custom_call.1} parent=1 // pred_check
      _
    $region19: #{tpu_custom_call.1} parent=1 // pred_check_branch
      %45 = sbr.rel (0) target = $region21
    $region20: #{tpu_custom_call.1} parent=1 // pred_region
      %s47 = ssub.s32 64, 64
      %48 = vsyncadd [#allocation4], %s47
      %s50 = sshll.u32 [#allocation7], 4
      %s51 = int_to_ptr.vmem [resolvable:$true] %s50
      %53 = dma.vmem_to_hbm [thread:$0]  %s51, 64, %s2, [#allocation4]
    $region21: #{tpu_custom_call.1} parent=1 // pred_fallthru
      _
    // Predicated region
    $region22: #{tpu_custom_call.1} parent=1 // pred_check
      _
    $region23: #{tpu_custom_call.1} parent=1 // pred_check_branch
      %55 = sbr.rel (0) target = $region25
    $region24: #{tpu_custom_call.1} parent=1 // pred_region
      %56 = dma.done [#allocation4], 64
    $region25: #{tpu_custom_call.1} parent=1 // pred_fallthru
      _
    %57 = vsyncpa [#allocation3], 1
    %58 = vsyncpa [#allocation6], 1
    %59 = vsyncpa [#allocation4], 1

</llo_original>
